<compile_context>
chip_gen: v6e
topology: v6e:2x2x1
jax: 0.10.0
libtpu: 0.0.40
codegen_flags: <defaults>
</compile_context>

<pallas_src>
import jax
import jax.numpy as jnp
from jax.experimental import pallas as pl
from jax.experimental.pallas import tpu as pltpu

_VMEM_BUDGET_BYTES = 24 * 1024 * 1024  # conservative: under 32 MiB scoped default


def _round_up(x, m):
    return (x + m - 1) // m * m


def _min_sublane(dtype):
    itemsize = jnp.dtype(dtype).itemsize
    return {4: 8, 2: 16, 1: 32}.get(itemsize, 8)


def _pick_feature_tile(Dp, cap):
    """Largest multiple of 128 that divides Dp and is <= cap."""
    cap = min(cap, Dp)
    best = None
    t = 128
    while t <= cap:
        if Dp % t == 0:
            best = t
        t += 128
    return best


def _pick_m_tile(Mp, cap, sub):
    """Pick tm (multiple of `sub`, <= cap) minimizing padded rows; prefer big tiles."""
    cap = min(cap, Mp)
    cap -= cap % sub
    cap = max(cap, sub)
    if Mp <= cap:
        return Mp  # full-M tile: W streamed from HBM exactly once per call
    best_tm, best_padded = sub, _round_up(Mp, sub)
    tm = cap
    while tm >= sub:
        padded = _round_up(Mp, tm)
        if padded < best_padded:
            best_tm, best_padded = tm, padded
        tm -= sub
    return best_tm


def _vmem_bytes(tm, tn, tk, itemsize):
    # double-buffered x, W, bias, out tiles + acc (f32) + xres scratch
    return (2 * itemsize * (tm * tk + tk * tn + tn + tm * tn)
            + 4 * tm * tn
            + itemsize * tm * tn)


def _residual_block_kernel(x_ref, w_ref, b_ref, o_ref, acc_ref, xres_ref):
    """One (i, j, k) grid step of out = relu(x @ W + b) + x.

    x_ref:    (tm, tk) slab of x                 (indexed i, k)
    w_ref:    (tk, tn) slab of W                 (indexed k, j)
    b_ref:    (1,  tn) slab of bias              (indexed 0, j)
    o_ref:    (tm, tn) output slab               (indexed i, j)
    acc_ref:  (tm, tn) f32 VMEM accumulator (persists across the K axis)
    xres_ref: (tm, tn) VMEM stash of the residual x tile (captured at k == j)
    """
    j = pl.program_id(1)
    k = pl.program_id(2)

    @pl.when(k == 0)
    def _():
        # Fold the bias into the accumulator init (free on the init step).
        acc_ref[...] = jnp.broadcast_to(
            b_ref[...].astype(jnp.float32), acc_ref.shape)

    # With tn == tk the matmul x tile at k == j spans exactly the columns of
    # output block (i, j); stash it for the residual add in the epilogue.
    @pl.when(k == j)
    def _():
        xres_ref[...] = x_ref[...]

    acc_ref[...] += jnp.dot(
        x_ref[...], w_ref[...], preferred_element_type=jnp.float32)

    @pl.when(k == pl.num_programs(2) - 1)
    def _():
        h = jnp.maximum(acc_ref[...], 0.0) + xres_ref[...].astype(jnp.float32)
        o_ref[...] = h.astype(o_ref.dtype)


def _residual_block_padded(x, wp, bp, d_logical, *, tm=None, tn=None, tk=None):
    """x: [B, D]; wp: [Dp, Dp] zero-padded weight; bp: [1, Dp] zero-padded bias."""
    B, D = x.shape
    assert D == d_logical
    Dp = wp.shape[0]
    itemsize = jnp.dtype(x.dtype).itemsize
    sub = _min_sublane(x.dtype)

    # ---- feature tile (tn == tk so the residual-stash trick is valid) ----
    user_tiles = tn is not None or tk is not None or tm is not None
    if tn is not None or tk is not None:
        tn = tn if tn is not None else tk
        tk = tk if tk is not None else tn
        assert tn == tk, "residual stash requires tn == tk"
        assert tn % 128 == 0 and Dp % tn == 0, "tn must be a 128-multiple divisor of padded D"
    else:
        tn = tk = _pick_feature_tile(Dp, 1024)

    # ---- M tile: full M if it fits the VMEM budget, else minimal padding ----
    Mp = _round_up(B, sub)
    if tm is not None:
        assert tm % sub == 0, f"tm must be a multiple of {sub} for dtype {x.dtype}"
    else:
        fixed = 2 * itemsize * (tk * tn + tn)
        per_tm = 2 * itemsize * (tk + tn) + (4 + itemsize) * tn
        tm_cap = max(sub, (_VMEM_BUDGET_BYTES - fixed) // per_tm)
        tm = _pick_m_tile(Mp, tm_cap, sub)

        # v7x has two TensorCores: make sure the parallel (M, N) grid has at
        # least two blocks so one core does not idle.
        Mpad_try = _round_up(Mp, tm)
        if (Mpad_try // tm) * (Dp // tn) < 2:
            split_n = _pick_feature_tile(Dp, Dp // 2) if Dp >= 256 else None
            if split_n is not None:
                tn = tk = split_n
            elif Mp >= 2 * sub:
                tm = _round_up((Mp + 1) // 2, sub)

    Mpad = _round_up(Mp, tm)
    Dpad = Dp
    assert Dpad % tn == 0 and Dpad % tk == 0

    if not user_tiles:
        assert _vmem_bytes(tm, tn, tk, itemsize) <= 32 * 1024 * 1024

    xp = x if (Mpad, Dpad) == (B, D) else jnp.pad(
        x, ((0, Mpad - B), (0, Dpad - D)))

    grid = (Mpad // tm, Dpad // tn, Dpad // tk)

    flops = 2 * Mpad * Dpad * Dpad
    bytes_accessed = itemsize * (2 * Mpad * Dpad + Dpad * Dpad + Dpad)

    out = pl.pallas_call(
        _residual_block_kernel,
        out_shape=jax.ShapeDtypeStruct((Mpad, Dpad), x.dtype),
        grid=grid,
        in_specs=[
            pl.BlockSpec((tm, tk), lambda i, j, k: (i, k)),  # x (matmul operand)
            pl.BlockSpec((tk, tn), lambda i, j, k: (k, j)),  # W
            pl.BlockSpec((1, tn), lambda i, j, k: (0, j)),   # bias
        ],
        out_specs=pl.BlockSpec((tm, tn), lambda i, j, k: (i, j)),
        scratch_shapes=[
            pltpu.VMEM((tm, tn), jnp.float32),   # accumulator
            pltpu.VMEM((tm, tn), x.dtype),       # residual x stash
        ],
        compiler_params=pltpu.CompilerParams(
            dimension_semantics=("parallel", "parallel", "arbitrary"),
        ),
        cost_estimate=pl.CostEstimate(
            flops=flops, transcendentals=0, bytes_accessed=bytes_accessed),
    )(xp, wp, bp)

    if (Mpad, Dpad) != (B, D):
        out = out[:B, :D]
    return out


def make_residual_block(w, b, *, tm=None, tn=None, tk=None):
    """Pad weight/bias ONCE (init time) and return fn(x) = relu(x @ w + b) + x.

    w: [D, D] in (in, out) layout, i.e. the transpose of torch's nn.Linear
    weight; b: [D].
    """
    D_in, D_out = w.shape
    assert D_in == D_out, "ResidualBlock requires a square Linear(dim, dim)"
    D = D_in
    assert b.shape == (D,)

    Dp = _round_up(D, 128)
    wp = w if Dp == D else jnp.pad(w, ((0, Dp - D), (0, Dp - D)))
    bp = (b if Dp == D else jnp.pad(b, (0, Dp - D))).reshape(1, Dp)

    def fn(x):
        return _residual_block_padded(x, wp, bp, D, tm=tm, tn=tn, tk=tk)

    return fn


def residual_block(x, w, b, **tile_kwargs):
    """Convenience one-shot wrapper (pads the weight on every call)."""
    return make_residual_block(w, b, **tile_kwargs)(x)


def _reference(x, w, b):
    return jnp.maximum(x @ w + b, 0.0) + x


if __name__ == "__main__":
    key = jax.random.PRNGKey(0)

    # --- small shapes consistent with the module (Linear(dim, dim)) ---
    B, D = 8, 32
    kx, kw, kb = jax.random.split(key, 3)
    x = jax.random.normal(kx, (B, D), dtype=jnp.float32)

    # Deterministic init mimicking nn.Linear uniform(-1/sqrt(D), 1/sqrt(D)).
    bound = 1.0 / jnp.sqrt(jnp.float32(D))
    w_torch = jax.random.uniform(kw, (D, D), minval=-bound, maxval=bound,
                                 dtype=jnp.float32)  # torch layout [out, in]
    b = jax.random.uniform(kb, (D,), minval=-bound, maxval=bound,
                           dtype=jnp.float32)
    w = w_torch.T  # kernel layout [in, out]

    block = make_residual_block(w, b)   # weight padded once at init
    out = jax.block_until_ready(block(x))
    ref = _reference(x, w, b)
    assert jnp.allclose(out, ref, atol=1e-5, rtol=1e-5), "mismatch (toy shape)"

    # --- second check: non-pow2 feature dim & multi-step M/N/K tiled path ---
    B2, D2 = 96, 384   # Dp = 384 -> auto tn = tk = 128, grid (1, 3, 3)
    kx2, kw2, kb2 = jax.random.split(jax.random.PRNGKey(1), 3)
    x2 = jax.random.normal(kx2, (B2, D2), dtype=jnp.float32)
    w2 = jax.random.normal(kw2, (D2, D2), dtype=jnp.float32) * 0.05
    b2 = jax.random.normal(kb2, (D2,), dtype=jnp.float32) * 0.05
    out2 = jax.block_until_ready(residual_block(x2, w2, b2))
    ref2 = _reference(x2, w2, b2)
    assert jnp.allclose(out2, ref2, atol=1e-4, rtol=1e-4), "mismatch (auto tiles)"

    # --- third check: user-specified tiles exercising ragged M padding ---
    out3 = jax.block_until_ready(residual_block(x2, w2, b2, tm=32, tn=128, tk=128))
    assert jnp.allclose(out3, ref2, atol=1e-4, rtol=1e-4), "mismatch (user tiles)"

    print("KERNEL_OK")
</pallas_src>

<mosaic_0001>
module attributes {stable_mosaic.version = 11 : i64} {
  func.func @_residual_block_kernel(%arg0: i32, %arg1: i32, %arg2: i32, %arg3: memref<8x128xf32, #tpu.memory_space<vmem>>, %arg4: memref<128x128xf32, #tpu.memory_space<vmem>>, %arg5: memref<1x128xf32, #tpu.memory_space<vmem>>, %arg6: memref<8x128xf32, #tpu.memory_space<vmem>>, %arg7: memref<8x128xf32, #tpu.memory_space<vmem>>, %arg8: memref<8x128xf32, #tpu.memory_space<vmem>>) attributes {dimension_semantics = [#tpu.dimension_semantics<parallel>, #tpu.dimension_semantics<parallel>, #tpu.dimension_semantics<arbitrary>], iteration_bounds = array<i64: 1, 1, 1>, scalar_prefetch = 0 : i64, scratch_operands = 2 : i64, tpu.core_type = #tpu.core_type<tc>, window_params = [{transform_indices = @transform_0, window_bounds = array<i64: 8, 128>}, {transform_indices = @transform_1, window_bounds = array<i64: 128, 128>}, {transform_indices = @transform_2, window_bounds = array<i64: 1, 128>}, {transform_indices = @transform_3, window_bounds = array<i64: 8, 128>}]} {
    %c0_i32 = arith.constant 0 : i32
    %0 = arith.cmpi eq, %arg2, %c0_i32 : i32
    %1 = arith.extui %0 : i1 to i32
    %c0_i32_0 = arith.constant 0 : i32
    %2 = arith.cmpi ne, %1, %c0_i32_0 : i32
    scf.if %2 {
      %c0_11 = arith.constant 0 : index
      %c0_12 = arith.constant 0 : index
      %15 = vector.load %arg5[%c0_11, %c0_12] : memref<1x128xf32, #tpu.memory_space<vmem>>, vector<1x128xf32>
      %16 = vector.shape_cast %15 : vector<1x128xf32> to vector<1x128xf32>
      %17 = vector.broadcast %16 : vector<1x128xf32> to vector<8x128xf32>
      %c0_13 = arith.constant 0 : index
      %c0_14 = arith.constant 0 : index
      %18 = vector.load %arg7[%c0_13, %c0_14] : memref<8x128xf32, #tpu.memory_space<vmem>>, vector<8x128xf32>
      tpu.vector_store %arg7[%c0_13, %c0_14], %17 {strides = array<i32>} : memref<8x128xf32, #tpu.memory_space<vmem>>, vector<8x128xf32>,
    } else {
    }
    %3 = arith.cmpi eq, %arg2, %arg1 : i32
    %4 = arith.extui %3 : i1 to i32
    %c0_i32_1 = arith.constant 0 : i32
    %5 = arith.cmpi ne, %4, %c0_i32_1 : i32
    scf.if %5 {
      %c0_11 = arith.constant 0 : index
      %c0_12 = arith.constant 0 : index
      %15 = vector.load %arg3[%c0_11, %c0_12] : memref<8x128xf32, #tpu.memory_space<vmem>>, vector<8x128xf32>
      %c0_13 = arith.constant 0 : index
      %c0_14 = arith.constant 0 : index
      %16 = vector.load %arg8[%c0_13, %c0_14] : memref<8x128xf32, #tpu.memory_space<vmem>>, vector<8x128xf32>
      tpu.vector_store %arg8[%c0_13, %c0_14], %15 {strides = array<i32>} : memref<8x128xf32, #tpu.memory_space<vmem>>, vector<8x128xf32>,
    } else {
    }
    %c0 = arith.constant 0 : index
    %c0_2 = arith.constant 0 : index
    %6 = vector.load %arg7[%c0, %c0_2] : memref<8x128xf32, #tpu.memory_space<vmem>>, vector<8x128xf32>
    %c0_3 = arith.constant 0 : index
    %c0_4 = arith.constant 0 : index
    %7 = vector.load %arg3[%c0_3, %c0_4] : memref<8x128xf32, #tpu.memory_space<vmem>>, vector<8x128xf32>
    %c0_5 = arith.constant 0 : index
    %c0_6 = arith.constant 0 : index
    %8 = vector.load %arg4[%c0_5, %c0_6] : memref<128x128xf32, #tpu.memory_space<vmem>>, vector<128x128xf32>
    %cst = arith.constant dense<0.000000e+00> : vector<8x128xf32>
    %9 = tpu.matmul %7, %8, %cst {dimension_numbers = #tpu.dot_dimension_numbers<[1], [0], [0], [1], [0, 0, 1, 1], [], []>} : vector<8x128xf32>, vector<128x128xf32>, vector<8x128xf32> -> vector<8x128xf32>
    %10 = arith.addf %6, %9 : vector<8x128xf32>
    %c0_7 = arith.constant 0 : index
    %c0_8 = arith.constant 0 : index
    %11 = vector.load %arg7[%c0_7, %c0_8] : memref<8x128xf32, #tpu.memory_space<vmem>>, vector<8x128xf32>
    tpu.vector_store %arg7[%c0_7, %c0_8], %10 {strides = array<i32>} : memref<8x128xf32, #tpu.memory_space<vmem>>, vector<8x128xf32>,
    %c0_i32_9 = arith.constant 0 : i32
    %12 = arith.cmpi eq, %arg2, %c0_i32_9 : i32
    %13 = arith.extui %12 : i1 to i32
    %c0_i32_10 = arith.constant 0 : i32
    %14 = arith.cmpi ne, %13, %c0_i32_10 : i32
    scf.if %14 {
      %c0_11 = arith.constant 0 : index
      %c0_12 = arith.constant 0 : index
      %15 = vector.load %arg7[%c0_11, %c0_12] : memref<8x128xf32, #tpu.memory_space<vmem>>, vector<8x128xf32>
      %cst_13 = arith.constant 0.000000e+00 : f32
      %16 = vector.broadcast %cst_13 : f32 to vector<8x128xf32>
      %17 = arith.maximumf %15, %16 : vector<8x128xf32>
      %c0_14 = arith.constant 0 : index
      %c0_15 = arith.constant 0 : index
      %18 = vector.load %arg8[%c0_14, %c0_15] : memref<8x128xf32, #tpu.memory_space<vmem>>, vector<8x128xf32>
      %19 = arith.addf %17, %18 : vector<8x128xf32>
      %c0_16 = arith.constant 0 : index
      %c0_17 = arith.constant 0 : index
      %20 = vector.load %arg6[%c0_16, %c0_17] : memref<8x128xf32, #tpu.memory_space<vmem>>, vector<8x128xf32>
      tpu.vector_store %arg6[%c0_16, %c0_17], %19 {strides = array<i32>} : memref<8x128xf32, #tpu.memory_space<vmem>>, vector<8x128xf32>,
    } else {
    }
    return
  }
  func.func @transform_0(%arg0: i32, %arg1: i32, %arg2: i32) -> (i32, i32) {
    %c0_i32 = arith.constant 0 : i32
    return %arg0, %arg2 : i32, i32
  }
  func.func @transform_1(%arg0: i32, %arg1: i32, %arg2: i32) -> (i32, i32) {
    %c0_i32 = arith.constant 0 : i32
    return %arg2, %arg1 : i32, i32
  }
  func.func @transform_2(%arg0: i32, %arg1: i32, %arg2: i32) -> (i32, i32) {
    %c0_i32 = arith.constant 0 : i32
    %c0_i32_0 = arith.constant 0 : i32
    return %c0_i32, %arg1 : i32, i32
  }
  func.func @transform_3(%arg0: i32, %arg1: i32, %arg2: i32) -> (i32, i32) {
    %c0_i32 = arith.constant 0 : i32
    return %arg0, %arg1 : i32, i32
  }
}

</mosaic_0001>

<llo_original>
// kernel: tpu_custom_call.1
$region0: #{tpu_custom_call.1}
  #allocation0 [shape = 'u32[]', space=smem, size = 0x4, offset = 0x4, fixed_abs, tag = 'smem constant byte address 0x4 - core index']
  #allocation1 [shape = 'u32[144,128]{1,0:T(1,128)}', space=vmem, size = 0x12000, scoped, tag = 'internal scratch']
  #allocation2 [shape = 'f32[8,128]{1,0:T(8,128)}', space=vmem, size = 0x1000, scoped, tag = 'scratch operand']
  #allocation3 [shape = 'f32[8,128]{1,0:T(8,128)}', space=vmem, size = 0x1000, scoped, tag = 'scratch operand']
  %s0 = inlined_call_operand.hbm [shape: f32[8,128], index: 0, kind: input, shape index: {}]
  %s1 = inlined_call_operand.hbm [shape: f32[128,128], index: 1, kind: input, shape index: {}]
  %s2 = inlined_call_operand.vmem [shape: f32[1,128], index: 2, kind: input, shape index: {}]
  %s3 = inlined_call_operand.hbm [shape: f32[8,128], index: 3, kind: output, shape index: {}]
  %s4 = sld [smem:[#allocation0]]
  $region42: #{tpu_custom_call.1} parent=0
    _
  %s6 = ssub.s32 1, %s4
  %s7 = scalar_select 0, %s6, %s4
  $region1: #{tpu_custom_call.1} parent=0
    #allocation4 [shape = 'u8[4096]{0}', space=vmem, size = 0x1000, scoped, tag = 'input window, operand 0, single buffered']
    #allocation5 [shape = 's32[1]{0}', space=sflag, size = 0x4, scoped, tag = 'scoped memory for tpu_custom_call.1']
    #allocation6 [shape = 's32[1]{0}', space=sflag, size = 0x4, scoped, tag = 'scoped memory for tpu_custom_call.1']
    #allocation7 [shape = 'u8[65536]{0}', space=vmem, size = 0x10000, scoped, tag = 'input window, operand 1, single buffered']
    #allocation8 [shape = 's32[1]{0}', space=sflag, size = 0x4, scoped, tag = 'scoped memory for tpu_custom_call.1']
    #allocation9 [shape = 'u8[4096]{0}', space=vmem, size = 0x1000, scoped, tag = 'output window, operand 0, single buffered']
    %8 = vsyncpa [#allocation5], 0
    %9 = vsyncpa [#allocation8], 0
    %10 = vsyncpa [#allocation6], 0
    // Predicated region
    $region2: #{tpu_custom_call.1} parent=1 // pred_check
      _
    $region3: #{tpu_custom_call.1} parent=1 // pred_check_branch
      %12 = sbr.rel (0) target = $region5
    $region4: #{tpu_custom_call.1} parent=1 // pred_region
      %s14 = ssub.s32 128, 128
      %15 = vsyncadd [#allocation5], %s14
      %s17 = sshll.u32 [#allocation4], 4
      %s18 = int_to_ptr.vmem [resolvable:$true] %s17
      %20 = dma.hbm_to_vmem [thread:$0]  %s0, 128, %s18, [#allocation5]
    $region5: #{tpu_custom_call.1} parent=1 // pred_fallthru
      _
    // Predicated region
    $region6: #{tpu_custom_call.1} parent=1 // pred_check
      _
    $region7: #{tpu_custom_call.1} parent=1 // pred_check_branch
      %22 = sbr.rel (0) target = $region9
    $region8: #{tpu_custom_call.1} parent=1 // pred_region
      %s24 = ssub.s32 2048, 2048
      %25 = vsyncadd [#allocation8], %s24
      %s26 = sshll.u32 [#allocation7], 4
      %s27 = int_to_ptr.vmem [resolvable:$true] %s26
      %32 = dma.hbm_to_vmem [thread:$0]  %s1, 2048, %s27, [#allocation8], 128, 128, 8
    $region9: #{tpu_custom_call.1} parent=1 // pred_fallthru
      _
    // Predicated region
    $region10: #{tpu_custom_call.1} parent=1 // pred_check
      _
    $region11: #{tpu_custom_call.1} parent=1 // pred_check_branch
      %34 = sbr.rel (0) target = $region13
    $region12: #{tpu_custom_call.1} parent=1 // pred_region
      _
    $region13: #{tpu_custom_call.1} parent=1 // pred_fallthru
      _
    // Predicated region
    $region14: #{tpu_custom_call.1} parent=1 // pred_check
      _
    $region15: #{tpu_custom_call.1} parent=1 // pred_check_branch
      %36 = sbr.rel (0) target = $region17
    $region16: #{tpu_custom_call.1} parent=1 // pred_region
      %37 = dma.done [#allocation5], 128
    $region17: #{tpu_custom_call.1} parent=1 // pred_fallthru
      _
    // Predicated region
    $region18: #{tpu_custom_call.1} parent=1 // pred_check
      _
    $region19: #{tpu_custom_call.1} parent=1 // pred_check_branch
      %39 = sbr.rel (0) target = $region21
    $region20: #{tpu_custom_call.1} parent=1 // pred_region
      %40 = dma.done [#allocation8], 2048
    $region21: #{tpu_custom_call.1} parent=1 // pred_fallthru
      _
    %p41 = scmp.eq.s32.totalorder 0, 0
    // Predicated region
    $region22: #{tpu_custom_call.1} parent=1 // pred_check
      %p42 = pneg %p41
    $region23: #{tpu_custom_call.1} parent=1 // pred_check_branch
      %44 = sbr.rel (%p42) target = $region25
    $region24: #{tpu_custom_call.1} parent=1 // pred_region
      %v45 = vld [vmem:[%s2] sm:$0x1]
      %v47 = vlaneseq
      %v48 = vshrl.u32 %v47, 7
      %v49 = vsub.s32 0, %v48
      %v50 = vrot.slane %v45, %v49
      %52 = vst [vmem:[#allocation2] sm:$0xff] %v50
    $region25: #{tpu_custom_call.1} parent=1 // pred_fallthru
      _
    %p53 = scmp.eq.s32.totalorder 0, 0
    // Predicated region
    $region26: #{tpu_custom_call.1} parent=1 // pred_check
      %p54 = pneg %p53
    $region27: #{tpu_custom_call.1} parent=1 // pred_check_branch
      %56 = sbr.rel (%p54) target = $region29
    $region28: #{tpu_custom_call.1} parent=1 // pred_region
      %v57 = vld [vmem:[#allocation4] sm:$0xff]
      %58 = vst [vmem:[#allocation3] sm:$0xff] %v57
    $region29: #{tpu_custom_call.1} parent=1 // pred_fallthru
      _
    %v59 = vld [vmem:[#allocation2] sm:$0xff]
    %v60 = vld [vmem:[#allocation4] sm:$0xff]
    %v61 = vld [vmem:[#allocation7] sm:$0xff]
    %v62 = vld [vmem:[#allocation7 + $0x8] sm:$0xff]
    %v63 = vld [vmem:[#allocation7 + $0x10] sm:$0xff]
    %v64 = vld [vmem:[#allocation7 + $0x18] sm:$0xff]
    %v65 = vld [vmem:[#allocation7 + $0x20] sm:$0xff]
    %v66 = vld [vmem:[#allocation7 + $0x28] sm:$0xff]
    %v67 = vld [vmem:[#allocation7 + $0x30] sm:$0xff]
    %v68 = vld [vmem:[#allocation7 + $0x38] sm:$0xff]
    %v69 = vld [vmem:[#allocation7 + $0x40] sm:$0xff]
    %v70 = vld [vmem:[#allocation7 + $0x48] sm:$0xff]
    %v71 = vld [vmem:[#allocation7 + $0x50] sm:$0xff]
    %v72 = vld [vmem:[#allocation7 + $0x58] sm:$0xff]
    %v73 = vld [vmem:[#allocation7 + $0x60] sm:$0xff]
    %v74 = vld [vmem:[#allocation7 + $0x68] sm:$0xff]
    %v75 = vld [vmem:[#allocation7 + $0x70] sm:$0xff]
    %v76 = vld [vmem:[#allocation7 + $0x78] sm:$0xff]
    %77 = vmatprep.subr.mxu0 0.0
    %78 = vmatpush1.msra.mxu0 %v76
    %79 = vmatprep.subr.mxu0 0.0
    %80 = vmatpush1.msra.mxu0 %v75
    %81 = vmatprep.subr.mxu0 0.0
    %82 = vmatpush1.msra.mxu0 %v74
    %83 = vmatprep.subr.mxu0 0.0
    %84 = vmatpush1.msra.mxu0 %v73
    %85 = vmatprep.subr.mxu0 0.0
    %86 = vmatpush1.msra.mxu0 %v72
    %87 = vmatprep.subr.mxu0 0.0
    %88 = vmatpush1.msra.mxu0 %v71
    %89 = vmatprep.subr.mxu0 0.0
    %90 = vmatpush1.msra.mxu0 %v70
    %91 = vmatprep.subr.mxu0 0.0
    %92 = vmatpush1.msra.mxu0 %v69
    %93 = vmatprep.subr.mxu0 0.0
    %94 = vmatpush1.msra.mxu0 %v68
    %95 = vmatprep.subr.mxu0 0.0
    %96 = vmatpush1.msra.mxu0 %v67
    %97 = vmatprep.subr.mxu0 0.0
    %98 = vmatpush1.msra.mxu0 %v66
    %99 = vmatprep.subr.mxu0 0.0
    %100 = vmatpush1.msra.mxu0 %v65
    %101 = vmatprep.subr.mxu0 0.0
    %102 = vmatpush1.msra.mxu0 %v64
    %103 = vmatprep.subr.mxu0 0.0
    %104 = vmatpush1.msra.mxu0 %v63
    %105 = vmatprep.subr.mxu0 0.0
    %106 = vmatpush1.msra.mxu0 %v62
    %107 = vmatprep.subr.mxu0 0.0
    %108 = vmatpush1.msra.mxu0 %v61
    %109 = vmatprep.subr.mxu0 0.0
    %110 = vmatpush2.msra.mxu0 0.0
    %111 = vmatprep.subr.mxu0 0.0
    %112 = vmatpush2.msra.mxu0 0.0
    %113 = vmatprep.subr.mxu0 0.0
    %114 = vmatpush2.msra.mxu0 0.0
    %115 = vmatprep.subr.mxu0 0.0
    %116 = vmatpush2.msra.mxu0 0.0
    %117 = vmatprep.subr.mxu0 0.0
    %118 = vmatpush2.msra.mxu0 0.0
    %119 = vmatprep.subr.mxu0 0.0
    %120 = vmatpush2.msra.mxu0 0.0
    %121 = vmatprep.subr.mxu0 0.0
    %122 = vmatpush2.msra.mxu0 0.0
    %123 = vmatprep.subr.mxu0 0.0
    %124 = vmatpush2.msra.mxu0 0.0
    %125 = vmatprep.subr.mxu0 0.0
    %126 = vmatpush2.msra.mxu0 0.0
    %127 = vmatprep.subr.mxu0 0.0
    %128 = vmatpush2.msra.mxu0 0.0
    %129 = vmatprep.subr.mxu0 0.0
    %130 = vmatpush2.msra.mxu0 0.0
    %131 = vmatprep.subr.mxu0 0.0
    %132 = vmatpush2.msra.mxu0 0.0
    %133 = vmatprep.subr.mxu0 0.0
    %134 = vmatpush2.msra.mxu0 0.0
    %135 = vmatprep.subr.mxu0 0.0
    %136 = vmatpush2.msra.mxu0 0.0
    %137 = vmatprep.subr.mxu0 0.0
    %138 = vmatpush2.msra.mxu0 0.0
    %139 = vmatprep.subr.mxu0 0.0
    %140 = vmatpush2.msra.mxu0 0.0
    %141 = vmatprep.mubr.f32.mxu0 0.0
    %142 = vmatmul.mubr.f32.gmra.mxu0 %v60
    %v143 = vpop.f32.mrf.mxu0
    %v144 = vadd.f32 0.0, %v143
    %v145 = vpop.f32.mrf.mxu0
    %146 = vdwg.mxu0
    %v147 = vadd.f32 %v59, %v144
    %148 = vst [vmem:[#allocation2] sm:$0xff] %v147
    // Predicated region
    $region30: #{tpu_custom_call.1} parent=1 // pred_check
      %p149 = pneg %p41
    $region31: #{tpu_custom_call.1} parent=1 // pred_check_branch
      %151 = sbr.rel (%p149) target = $region33
    $region32: #{tpu_custom_call.1} parent=1 // pred_region
      %v152 = vld [vmem:[#allocation2] sm:$0xff]
      %v153 = vmax.f32 %v152, 0.0
      %v154 = vld [vmem:[#allocation3] sm:$0xff]
      %v155 = vadd.f32 %v153, %v154
      %156 = vst [vmem:[#allocation9] sm:$0xff] %v155
    $region33: #{tpu_custom_call.1} parent=1 // pred_fallthru
      _
    // Predicated region
    $region34: #{tpu_custom_call.1} parent=1 // pred_check
      _
    $region35: #{tpu_custom_call.1} parent=1 // pred_check_branch
      %158 = sbr.rel (0) target = $region37
    $region36: #{tpu_custom_call.1} parent=1 // pred_region
      %s160 = ssub.s32 128, 128
      %161 = vsyncadd [#allocation6], %s160
      %s163 = sshll.u32 [#allocation9], 4
      %s164 = int_to_ptr.vmem [resolvable:$true] %s163
      %166 = dma.vmem_to_hbm [thread:$0]  %s164, 128, %s3, [#allocation6]
    $region37: #{tpu_custom_call.1} parent=1 // pred_fallthru
      _
    // Predicated region
    $region38: #{tpu_custom_call.1} parent=1 // pred_check
      _
    $region39: #{tpu_custom_call.1} parent=1 // pred_check_branch
      %168 = sbr.rel (0) target = $region41
    $region40: #{tpu_custom_call.1} parent=1 // pred_region
      %169 = dma.done [#allocation6], 128
    $region41: #{tpu_custom_call.1} parent=1 // pred_fallthru
      _
    %170 = vsyncpa [#allocation5], 1
    %171 = vsyncpa [#allocation8], 1
    %172 = vsyncpa [#allocation6], 1

</llo_original>
